<compile_context>
chip_gen: v7x
topology: tpu7x:2x2x1
jax: 0.10.0
libtpu: 0.0.40
codegen_flags: <defaults>
</compile_context>

<pallas_src>
import itertools
from functools import partial

import numpy as np
import jax
import jax.numpy as jnp
from jax.experimental import pallas as pl
from jax.experimental.pallas import tpu as pltpu

_LANES = 128


def _round_up(x: int, m: int) -> int:
    return -(-x // m) * m


# ---------------------------------------------------------------------------
# Host-side Hungarian discretization (maximizes the matching score).
# ---------------------------------------------------------------------------
def hungarian_host(pred, src_ns, tgt_ns):
    pred = np.asarray(pred, dtype=np.float64)
    out = np.zeros(pred.shape, dtype=np.int8)
    try:
        from scipy.optimize import linear_sum_assignment
    except Exception:  # pragma: no cover - tiny-demo fallback
        linear_sum_assignment = None
    for b in range(pred.shape[0]):
        ns, nt = int(src_ns[b]), int(tgt_ns[b])
        sub = pred[b, :ns, :nt]
        if linear_sum_assignment is not None:
            r, c = linear_sum_assignment(-sub)
            out[b, r, c] = 1
        else:
            best_perm, best_val = None, -np.inf
            for perm in itertools.permutations(range(nt), ns):
                val = sub[np.arange(ns), list(perm)].sum()
                if val > best_val:
                    best_val, best_perm = val, perm
            for i, j in enumerate(best_perm):
                out[b, i, j] = 1
    return out


# ---------------------------------------------------------------------------
# Pallas kernel: streaming masked BCE with chunked in-kernel reduction.
#   s_ref : (tr, 128) f32   predicted doubly-stochastic entries (possibly garbage
#                            in padded / over-read rows -- gated by code == 0)
#   c_ref : (tr, 128) int8  code = gt_bit | (dis_bit << 1), 0 outside valid region
#   out   : (1, 8, 128) f32 lane-dense per-block partial sums
# ---------------------------------------------------------------------------
def _hung_bce_kernel(s_ref, c_ref, out_ref, *, chunk_rows):
    n_chunks = s_ref.shape[0] // chunk_rows

    def body(ci, acc):
        r0 = pl.multiple_of(ci * chunk_rows, chunk_rows)
        s = s_ref[pl.ds(r0, chunk_rows), :]
        c = c_ref[pl.ds(r0, chunk_rows), :].astype(jnp.int32)

        g = (c & 1) > 0        # gt bit (already restricted to the valid submatrix)
        nz = c > 0             # Z = OR(Hungarian(S), X_gt) restricted to valid region

        s = jnp.clip(s, 0.0, 1.0)                 # PyTorch BCE input contract
        # gp in {0,1} and Z >= gt  =>  BCE term = -log(g ? s : 1 - s), clamped at -100,
        # and exactly 0 wherever Z == 0 (select also discards garbage/NaN pred rows).
        x = jnp.where(g, s, 1.0 - s)
        bce = jnp.where(nz, -jnp.maximum(jnp.log(x), -100.0), 0.0)

        # Fold (chunk_rows,128) -> (8,128): pure vreg adds (VALU), tiny carry.
        folded = jnp.sum(bce.reshape(chunk_rows // 8, 8, _LANES), axis=0)
        return acc + folded

    acc = jax.lax.fori_loop(0, n_chunks, body,
                            jnp.zeros((8, _LANES), jnp.float32))
    out_ref[...] = acc[None]


# ---------------------------------------------------------------------------
# Wrapper: one fused prep pass (int8 code slab), copy-free pred slab when possible.
# ---------------------------------------------------------------------------
@partial(jax.jit, static_argnames=("block_rows", "chunk_rows", "target_blocks"))
def hung_bce_loss(pred_dsmat, gt_perm, dis_pred, src_ns, tgt_ns, *,
                  block_rows=4096, chunk_rows=256, target_blocks=8):
    """Hungarian-attention BCE loss averaged by sum(src_ns). Returns a scalar."""
    B, N1, N2 = pred_dsmat.shape
    f32 = jnp.float32
    src_ns = src_ns.astype(jnp.int32)
    tgt_ns = tgt_ns.astype(jnp.int32)

    total = B * N1 * N2
    n_rows = _round_up(total, _LANES) // _LANES           # rows of the 128-lane slab

    # ---- tile-size selection (static) ------------------------------------
    tr = -(-n_rows // target_blocks)                      # aim for >= target_blocks steps
    tr = max(32, min(int(block_rows), tr))                # int8 native tile: 32 sublanes
    tr = _round_up(tr, 32)
    cr = max(32, (min(int(chunk_rows), tr) // 32) * 32)   # in-kernel chunk rows
    tr = _round_up(tr, cr)                                # tr % cr == 0
    padded_rows = _round_up(n_rows, tr)
    num_blocks = padded_rows // tr

    # ---- single fused prep pass: pack gt/dis/validity into one int8 slab --
    row_ok = jnp.arange(N1, dtype=jnp.int32)[None, :, None] < src_ns[:, None, None]
    col_ok = jnp.arange(N2, dtype=jnp.int32)[None, None, :] < tgt_ns[:, None, None]
    valid = row_ok & col_ok
    g_bit = jnp.logical_and(gt_perm > 0.5, valid)
    d_bit = jnp.logical_and(dis_pred > 0.5, valid)
    code = g_bit.astype(jnp.int8) + 2 * d_bit.astype(jnp.int8)
    code_flat = jnp.reshape(code, (-1,))
    pad_c = padded_rows * _LANES - total
    if pad_c:
        code_flat = jnp.pad(code_flat, (0, pad_c))
    code_slab = jnp.reshape(code_flat, (padded_rows, _LANES))

    # ---- pred slab: copy-free reshape when total % 128 == 0 ---------------
    # Any rows beyond n_rows that the last ragged block over-reads are gated by
    # code == 0 in the kernel, so pred never needs padding up to padded_rows.
    pred_rows = max(n_rows, tr)                # always provide at least one full tile
    pred_flat = jnp.reshape(pred_dsmat.astype(f32), (-1,))
    pad_p = pred_rows * _LANES - total
    if pad_p:
        pred_flat = jnp.pad(pred_flat, (0, pad_p))
    pred_slab = jnp.reshape(pred_flat, (pred_rows, _LANES))

    partials = pl.pallas_call(
        partial(_hung_bce_kernel, chunk_rows=cr),
        out_shape=jax.ShapeDtypeStruct((num_blocks, 8, _LANES), f32),
        grid=(num_blocks,),
        in_specs=[
            pl.BlockSpec((tr, _LANES), lambda i: (i, 0)),   # pred (f32, 4 B/elem)
            pl.BlockSpec((tr, _LANES), lambda i: (i, 0)),   # code (int8, 1 B/elem)
        ],
        out_specs=pl.BlockSpec((1, 8, _LANES), lambda i: (i, 0, 0)),
        compiler_params=pltpu.CompilerParams(
            dimension_semantics=("parallel",),
            vmem_limit_bytes=32 * 1024 * 1024,
        ),
    )(pred_slab, code_slab)

    n_sum = jnp.sum(src_ns).astype(f32)
    return jnp.sum(partials) / n_sum


def permutation_loss_hung(pred_dsmat, gt_perm, src_ns, tgt_ns, **kw):
    """Mirrors PermutationLossHung.forward: Hungarian on host, masked BCE on TPU."""
    dis = hungarian_host(np.asarray(jax.device_get(pred_dsmat)),
                         np.asarray(jax.device_get(src_ns)),
                         np.asarray(jax.device_get(tgt_ns)))
    return hung_bce_loss(pred_dsmat, gt_perm, jnp.asarray(dis), src_ns, tgt_ns, **kw)


# ---------------------------------------------------------------------------
# Pure-numpy reference (mirrors the PyTorch forward) for sanity checks.
# ---------------------------------------------------------------------------
def _reference(pred, gt, dis, src_ns, tgt_ns):
    pred = np.asarray(pred, np.float64)
    gt = np.asarray(gt, np.float64)
    dis = np.asarray(dis, np.float64)
    z = np.minimum(gt + dis, 1.0)
    sp = z * pred
    gp = z * gt
    with np.errstate(divide="ignore"):
        log_s = np.maximum(np.log(np.clip(sp, 0.0, None)), -100.0)
        log_1ms = np.maximum(np.log(np.clip(1.0 - sp, 0.0, None)), -100.0)
    bce = -(gp * log_s + (1.0 - gp) * log_1ms)
    loss, n_sum = 0.0, 0.0
    for b in range(pred.shape[0]):
        loss += bce[b, :src_ns[b], :tgt_ns[b]].sum()
        n_sum += float(src_ns[b])
    return loss / n_sum


if __name__ == "__main__":
    key = jax.random.PRNGKey(0)

    # ---- Test 1: spec-sized example with a real host Hungarian step ----
    B, N1, N2 = 2, 8, 8
    src_ns = np.array([5, 6], dtype=np.int32)
    tgt_ns = np.array([6, 6], dtype=np.int32)

    k1, k2 = jax.random.split(key)
    pred = jax.nn.softmax(jax.random.normal(k1, (B, N1, N2), jnp.float32), axis=-1)

    rng = np.random.RandomState(0)
    gt_np = np.zeros((B, N1, N2), np.float32)
    for b in range(B):
        perm = rng.permutation(tgt_ns[b])[: src_ns[b]]
        gt_np[b, np.arange(src_ns[b]), perm] = 1.0
    gt = jnp.asarray(gt_np)

    loss1 = permutation_loss_hung(pred, gt, jnp.asarray(src_ns), jnp.asarray(tgt_ns))
    loss1 = float(jax.block_until_ready(loss1))
    dis_np = hungarian_host(np.asarray(pred), src_ns, tgt_ns)
    ref1 = _reference(np.asarray(pred), gt_np, dis_np, src_ns, tgt_ns)
    assert np.allclose(loss1, ref1, rtol=1e-4, atol=1e-4), (loss1, ref1)

    # ---- Test 2: larger batch, multi-block grid, copy-free ragged pred path ----
    B2, M1, M2 = 40, 16, 16                      # total = 10240 -> 80 slab rows
    rng2 = np.random.RandomState(1)
    src2 = rng2.randint(8, M1 + 1, size=B2).astype(np.int32)
    tgt2 = np.maximum(src2, rng2.randint(8, M2 + 1, size=B2)).astype(np.int32)
    k3, _ = jax.random.split(k2)
    pred2 = jax.nn.softmax(jax.random.normal(k3, (B2, M1, M2), jnp.float32), axis=-1)
    gt2 = np.zeros((B2, M1, M2), np.float32)
    dis2 = np.zeros((B2, M1, M2), np.float32)    # stand-in 0/1 discretization
    for b in range(B2):
        p1 = rng2.permutation(tgt2[b])[: src2[b]]
        p2 = rng2.permutation(tgt2[b])[: src2[b]]
        gt2[b, np.arange(src2[b]), p1] = 1.0
        dis2[b, np.arange(src2[b]), p2] = 1.0

    loss2 = hung_bce_loss(pred2, jnp.asarray(gt2), jnp.asarray(dis2),
                          jnp.asarray(src2), jnp.asarray(tgt2))
    loss2 = float(jax.block_until_ready(loss2))
    ref2 = _reference(np.asarray(pred2), gt2, dis2, src2, tgt2)
    assert np.allclose(loss2, ref2, rtol=1e-4, atol=1e-4), (loss2, ref2)

    print("KERNEL_OK")
</pallas_src>

<mosaic_0001>
module attributes {stable_mosaic.version = 11 : i64} {
  func.func @_hung_bce_kernel(%arg0: i32, %arg1: memref<32x128xf32, #tpu.memory_space<vmem>>, %arg2: memref<32x128xi8, #tpu.memory_space<vmem>>, %arg3: memref<1x8x128xf32, #tpu.memory_space<vmem>>) attributes {dimension_semantics = [#tpu.dimension_semantics<parallel>], iteration_bounds = array<i64: 1>, scalar_prefetch = 0 : i64, scratch_operands = 0 : i64, tpu.core_type = #tpu.core_type<tc>, window_params = [{transform_indices = @transform_0, window_bounds = array<i64: 32, 128>}, {transform_indices = @transform_1, window_bounds = array<i64: 32, 128>}, {transform_indices = @transform_2, window_bounds = array<i64: 1, 8, 128>}]} {
    %cst = arith.constant 0.000000e+00 : f32
    %0 = vector.broadcast %cst : f32 to vector<8x128xf32>
    %c0_i32 = arith.constant 0 : i32
    %c32_i32 = arith.constant 32 : i32
    %1 = arith.muli %c0_i32, %c32_i32 : i32
    %2 = tpu.assume_multiple %1, 32 : i32
    %3 = arith.index_cast %2 : i32 to index
    %c0 = arith.constant 0 : index
    %4 = vector.load %arg1[%3, %c0] : memref<32x128xf32, #tpu.memory_space<vmem>>, vector<32x128xf32>
    %5 = arith.index_cast %2 : i32 to index
    %c0_0 = arith.constant 0 : index
    %6 = vector.load %arg2[%5, %c0_0] : memref<32x128xi8, #tpu.memory_space<vmem>>, vector<32x128xi8>
    %7 = arith.extsi %6 : vector<32x128xi8> to vector<32x128xi32>
    %c1_i32 = arith.constant 1 : i32
    %8 = vector.broadcast %c1_i32 : i32 to vector<32x128xi32>
    %9 = arith.andi %7, %8 : vector<32x128xi32>
    %c0_i32_1 = arith.constant 0 : i32
    %10 = vector.broadcast %c0_i32_1 : i32 to vector<32x128xi32>
    %11 = arith.cmpi sgt, %9, %10 : vector<32x128xi32>
    %c0_i32_2 = arith.constant 0 : i32
    %12 = vector.broadcast %c0_i32_2 : i32 to vector<32x128xi32>
    %13 = arith.cmpi sgt, %7, %12 : vector<32x128xi32>
    %cst_3 = arith.constant 0.000000e+00 : f32
    %cst_4 = arith.constant 1.000000e+00 : f32
    %14 = vector.broadcast %cst_3 : f32 to vector<32x128xf32>
    %15 = arith.maximumf %14, %4 : vector<32x128xf32>
    %16 = vector.broadcast %cst_4 : f32 to vector<32x128xf32>
    %17 = arith.minimumf %16, %15 : vector<32x128xf32>
    %cst_5 = arith.constant 1.000000e+00 : f32
    %18 = vector.broadcast %cst_5 : f32 to vector<32x128xf32>
    %19 = arith.subf %18, %17 : vector<32x128xf32>
    %20 = arith.select %11, %17, %19 : vector<32x128xi1>, vector<32x128xf32>
    %21 = math.log %20 : vector<32x128xf32>
    %cst_6 = arith.constant -1.000000e+02 : f32
    %22 = vector.broadcast %cst_6 : f32 to vector<32x128xf32>
    %23 = arith.maximumf %21, %22 : vector<32x128xf32>
    %cst_7 = arith.constant 0.000000e+00 : f32
    %24 = vector.broadcast %cst_7 : f32 to vector<32x128xf32>
    %25 = arith.subf %24, %23 : vector<32x128xf32>
    %cst_8 = arith.constant 0.000000e+00 : f32
    %26 = vector.broadcast %cst_8 : f32 to vector<32x128xf32>
    %27 = arith.select %13, %25, %26 : vector<32x128xi1>, vector<32x128xf32>
    %28 = vector.shape_cast %27 : vector<32x128xf32> to vector<4x8x128xf32>
    %cst_9 = arith.constant dense<0.000000e+00> : vector<8x128xf32>
    %29 = vector.multi_reduction <add>, %28, %cst_9 [0] : vector<4x8x128xf32> to vector<8x128xf32>
    %30 = arith.addf %0, %29 : vector<8x128xf32>
    %c1_i32_10 = arith.constant 1 : i32
    %31 = vector.shape_cast %30 : vector<8x128xf32> to vector<1x8x128xf32>
    %c0_11 = arith.constant 0 : index
    %c0_12 = arith.constant 0 : index
    %c0_13 = arith.constant 0 : index
    %32 = vector.load %arg3[%c0_11, %c0_12, %c0_13] : memref<1x8x128xf32, #tpu.memory_space<vmem>>, vector<1x8x128xf32>
    tpu.vector_store %arg3[%c0_11, %c0_12, %c0_13], %31 {strides = array<i32>} : memref<1x8x128xf32, #tpu.memory_space<vmem>>, vector<1x8x128xf32>,
    return
  }
  func.func @transform_0(%arg0: i32) -> (i32, i32) {
    %c0_i32 = arith.constant 0 : i32
    %c0_i32_0 = arith.constant 0 : i32
    return %arg0, %c0_i32 : i32, i32
  }
  func.func @transform_1(%arg0: i32) -> (i32, i32) {
    %c0_i32 = arith.constant 0 : i32
    %c0_i32_0 = arith.constant 0 : i32
    return %arg0, %c0_i32 : i32, i32
  }
  func.func @transform_2(%arg0: i32) -> (i32, i32, i32) {
    %c0_i32 = arith.constant 0 : i32
    %c0_i32_0 = arith.constant 0 : i32
    %c0_i32_1 = arith.constant 0 : i32
    return %arg0, %c0_i32, %c0_i32_0 : i32, i32, i32
  }
}

</mosaic_0001>

<llo_original>
// kernel: hung_bce_loss.1
$region0: #{hung_bce_loss.1}
  #allocation0 [shape = 'u32[]', space=smem, size = 0x4, offset = 0x4, fixed_abs, tag = 'smem constant byte address 0x4 - core index']
  #allocation1 [shape = 'u32[144,128]{1,0:T(1,128)}', space=vmem, size = 0x12000, scoped, tag = 'internal scratch']
  %s0 = inlined_call_operand.vmem [shape: f32[32,128], index: 0, kind: input, shape index: {}]
  %s1 = inlined_call_operand.vmem [shape: s8[32,128], index: 1, kind: input, shape index: {}]
  %s2 = inlined_call_operand.vmem [shape: f32[1,8,128], index: 2, kind: output, shape index: {}]
  %s3 = sld [smem:[#allocation0]]
  $region18: #{hung_bce_loss.1} parent=0
    _
  %s5 = ssub.s32 1, %s3
  %s6 = scalar_select 0, %s5, %s3
  // Predicated region
  $region2: #{hung_bce_loss.1} parent=0 // pred_check
    _
  $region3: #{hung_bce_loss.1} parent=0 // pred_check_branch
    %8 = sbr.rel (0) target = $region5
  $region4: #{hung_bce_loss.1} parent=0 // pred_region
    _
  $region5: #{hung_bce_loss.1} parent=0 // pred_fallthru
    _
  // Predicated region
  $region6: #{hung_bce_loss.1} parent=0 // pred_check
    _
  $region7: #{hung_bce_loss.1} parent=0 // pred_check_branch
    %10 = sbr.rel (0) target = $region9
  $region8: #{hung_bce_loss.1} parent=0 // pred_region
    _
  $region9: #{hung_bce_loss.1} parent=0 // pred_fallthru
    _
  %v11 = vld [vmem:[%s0] sm:$0xff]
  %v12 = vld [vmem:[%s0 + $0x8] sm:$0xff]
  %v13 = vld [vmem:[%s0 + $0x10] sm:$0xff]
  %v14 = vld [vmem:[%s0 + $0x18] sm:$0xff]
  %v15 = vld [vmem:[%s1] sm:$0xff]
  %v16 = vunpack.c.0.s8 %v15
  %v17 = vunpack.c.1.s8 %v15
  %v18 = vunpack.c.2.s8 %v15
  %v19 = vunpack.c.3.s8 %v15
  %v20 = vand.u32 %v16, 1
  %v21 = vand.u32 %v17, 1
  %v22 = vand.u32 %v18, 1
  %v23 = vand.u32 %v19, 1
  %vm24 = vcmp.gt.s32.totalorder %v20, 0
  %vm25 = vcmp.gt.s32.totalorder %v21, 0
  %vm26 = vcmp.gt.s32.totalorder %v22, 0
  %vm27 = vcmp.gt.s32.totalorder %v23, 0
  %vm28 = vcmp.gt.s32.totalorder %v16, 0
  %vm29 = vcmp.gt.s32.totalorder %v17, 0
  %vm30 = vcmp.gt.s32.totalorder %v18, 0
  %vm31 = vcmp.gt.s32.totalorder %v19, 0
  %v32 = vmax.f32 %v11, 0.0
  %v33 = vmax.f32 %v12, 0.0
  %v34 = vmax.f32 %v13, 0.0
  %v35 = vmax.f32 %v14, 0.0
  %v36 = vmin.f32 %v32, 1.0
  %v37 = vmin.f32 %v33, 1.0
  %v38 = vmin.f32 %v34, 1.0
  %v39 = vmin.f32 %v35, 1.0
  %v40 = vsub.f32 1.0, %v36
  %v41 = vsub.f32 1.0, %v37
  %v42 = vsub.f32 1.0, %v38
  %v43 = vsub.f32 1.0, %v39
  %v44 = vsel %vm24, %v36, %v40
  %v45 = vsel %vm25, %v37, %v41
  %v46 = vsel %vm26, %v38, %v42
  %v47 = vsel %vm27, %v39, %v43
  %v48 = vlog2.pop %v44
  %v49 = vmul.f32 %v48, 0.6931472
  %v50 = vlog2.pop %v45
  %v51 = vmul.f32 %v50, 0.6931472
  %v52 = vlog2.pop %v46
  %v53 = vmul.f32 %v52, 0.6931472
  %v54 = vlog2.pop %v47
  %v55 = vmul.f32 %v54, 0.6931472
  %v56 = vmax.f32 %v49, -100.0
  %v57 = vmax.f32 %v51, -100.0
  %v58 = vmax.f32 %v53, -100.0
  %v59 = vmax.f32 %v55, -100.0
  %v60 = vsub.f32 0.0, %v56
  %v61 = vsub.f32 0.0, %v57
  %v62 = vsub.f32 0.0, %v58
  %v63 = vsub.f32 0.0, %v59
  %v64 = vsel %vm28, %v60, 0.0
  %v65 = vsel %vm29, %v61, 0.0
  %v66 = vsel %vm30, %v62, 0.0
  %v67 = vsel %vm31, %v63, 0.0
  %v68 = vadd.f32 %v64, %v65
  %v69 = vadd.f32 %v68, %v66
  %v70 = vadd.f32 %v69, %v67
  %v71 = vadd.f32 %v70, 0.0
  %72 = vst [vmem:[%s2] sm:$0xff] %v71
  // Predicated region
  $region10: #{hung_bce_loss.1} parent=0 // pred_check
    _
  $region11: #{hung_bce_loss.1} parent=0 // pred_check_branch
    %74 = sbr.rel (0) target = $region13
  $region12: #{hung_bce_loss.1} parent=0 // pred_region
    _
  $region13: #{hung_bce_loss.1} parent=0 // pred_fallthru
    _
  // Predicated region
  $region14: #{hung_bce_loss.1} parent=0 // pred_check
    _
  $region15: #{hung_bce_loss.1} parent=0 // pred_check_branch
    %76 = sbr.rel (0) target = $region17
  $region16: #{hung_bce_loss.1} parent=0 // pred_region
    _
  $region17: #{hung_bce_loss.1} parent=0 // pred_fallthru
    _

</llo_original>
